<compile_context>
chip_gen: v7x
topology: tpu7x:2x2x1
jax: 0.10.0
libtpu: 0.0.40
codegen_flags: <defaults>
</compile_context>

<pallas_src>
import math

import jax
import jax.numpy as jnp
import numpy as np
from jax.experimental import pallas as pl
from jax.experimental.pallas import tpu as pltpu


def _build_fixed_table(c_in: int, d_model: int) -> jnp.ndarray:
    """Reproduces the frozen sinusoidal table from FixedEmbedding.__init__."""
    position = jnp.arange(0, c_in, dtype=jnp.float32)[:, None]                  # [c_in, 1]
    div_term = jnp.exp(jnp.arange(0, d_model, 2, dtype=jnp.float32)
                       * (-(math.log(10000.0) / d_model)))                       # [ceil(d/2)]
    w = jnp.zeros((c_in, d_model), dtype=jnp.float32)
    w = w.at[:, 0::2].set(jnp.sin(position * div_term))
    w = w.at[:, 1::2].set(jnp.cos(position * div_term)[:, : d_model // 2])       # odd-d_model safe
    return w


def _split_bf16x3(w: jnp.ndarray):
    """Exact-ish 3-way bf16 split: hi + mid + lo == w to ~1 f32 ulp."""
    hi = w.astype(jnp.bfloat16)
    r1 = w - hi.astype(jnp.float32)
    mid = r1.astype(jnp.bfloat16)
    r2 = r1 - mid.astype(jnp.float32)
    lo = r2.astype(jnp.bfloat16)
    return hi, mid, lo


def _embed_kernel(slab_ref, w_hi_ref, w_mid_ref, w_lo_ref, out_ref):
    # slab_ref : (tn, K)     int8/int32  lane c holds the global one-hot column
    #                                    index selected by this packed row.
    # w_*_ref  : (K, lanes)  bf16        3-way bf16 split of the block-diagonal
    #                                    f32 table.
    # out_ref  : (tn, lanes) f32         lane-dense packed output.
    slab = slab_ref[...].astype(jnp.int32)
    col = jax.lax.broadcasted_iota(jnp.int32, slab.shape, 1)
    onehot = jnp.where(slab == col, 1.0, 0.0).astype(jnp.bfloat16)   # 1 compare + 1 select/cast

    acc = jnp.dot(onehot, w_hi_ref[...], preferred_element_type=jnp.float32)
    acc = acc + jnp.dot(onehot, w_mid_ref[...], preferred_element_type=jnp.float32)
    acc = acc + jnp.dot(onehot, w_lo_ref[...], preferred_element_type=jnp.float32)
    out_ref[...] = acc


def fixed_embedding(x: jnp.ndarray, table: jnp.ndarray, *, block_rows: int | None = None) -> jnp.ndarray:
    """x: integer indices of shape [...]; returns [..., d_model] float32."""
    c_in, d_model = table.shape
    batch_shape = x.shape
    n = int(np.prod(batch_shape)) if batch_shape else 1
    if n == 0:
        return jnp.zeros((*batch_shape, d_model), jnp.float32)

    # ---- Lane packing: `pack` embeddings per 128-lane output row -------------
    if d_model <= 128 and 128 % d_model == 0 and c_in <= d_model:
        pack = 128 // d_model
        c_seg = d_model                                   # one-hot cols per packed slot
    else:
        pack = 1
        c_seg = max(128, ((c_in + 127) // 128) * 128)
    lanes = pack * d_model                                # output row width
    k_cols = pack * c_seg                                 # MXU contraction width

    # ---- Row tiling: ~2 MiB f32 output per step, >= 4 steps when work allows -
    m = pl.cdiv(n, pack)                                  # packed rows
    if block_rows is None:
        block_rows = max(32, (2 * 1024 * 1024) // (lanes * 4))
    block_rows = min(block_rows, max(32, ((pl.cdiv(m, 4) + 31) // 32) * 32))
    block_rows = max(32, (block_rows // 32) * 32)         # multiple of 32 (int8 tiling safe)
    m_pad = pl.cdiv(m, block_rows) * block_rows
    n_pad = m_pad * pack
    grid = (m_pad // block_rows,)

    # ---- Index prep (wrapper-side, once): clamp, pad, pack, lane-expand ------
    idx = jnp.clip(x.reshape(-1).astype(jnp.int32), 0, c_in - 1)
    idx = jnp.pad(idx, (0, n_pad - n)).reshape(m_pad, pack)
    g = idx + (jnp.arange(pack, dtype=jnp.int32) * c_seg)[None, :]    # global one-hot column id
    slab = jnp.repeat(g, c_seg, axis=1)                               # (m_pad, k_cols)
    slab_dtype = jnp.int8 if k_cols <= 128 else jnp.int32             # int8: values < 128
    slab = slab.astype(slab_dtype)

    # ---- Block-diagonal table + exact bf16 3-split (tiny; hoist in production)
    w = table.astype(jnp.float32)
    wbd = jnp.zeros((k_cols, lanes), jnp.float32)
    for p in range(pack):
        wbd = wbd.at[p * c_seg:p * c_seg + c_in, p * d_model:(p + 1) * d_model].set(w)
    w_hi, w_mid, w_lo = _split_bf16x3(wbd)

    cost = pl.CostEstimate(
        flops=int(6 * m_pad * k_cols * lanes),
        transcendentals=0,
        bytes_accessed=int(slab.size * slab.dtype.itemsize
                           + 4 * m_pad * lanes
                           + 3 * 2 * k_cols * lanes),
    )

    out = pl.pallas_call(
        _embed_kernel,
        out_shape=jax.ShapeDtypeStruct((m_pad, lanes), jnp.float32),
        grid_spec=pltpu.PrefetchScalarGridSpec(
            num_scalar_prefetch=0,
            grid=grid,
            in_specs=[
                pl.BlockSpec((block_rows, k_cols), lambda i: (i, 0)),   # index slab tile
                pl.BlockSpec((k_cols, lanes), lambda i: (0, 0)),        # table hi (resident)
                pl.BlockSpec((k_cols, lanes), lambda i: (0, 0)),        # table mid
                pl.BlockSpec((k_cols, lanes), lambda i: (0, 0)),        # table lo
            ],
            out_specs=pl.BlockSpec((block_rows, lanes), lambda i: (i, 0)),
        ),
        compiler_params=pltpu.CompilerParams(
            dimension_semantics=("parallel",),
        ),
        cost_estimate=cost,
    )(slab, w_hi, w_mid, w_lo)

    # Unpack lanes back to individual embedding rows, trim padding, restore shape.
    return out.reshape(n_pad, d_model)[:n].reshape(*batch_shape, d_model)


if __name__ == "__main__":
    c_in = 16      # vocabulary size (e.g. a calendar-feature cardinality)
    d_model = 32   # embedding dimension
    B, L = 2, 8

    table = _build_fixed_table(c_in, d_model)

    key = jax.random.PRNGKey(0)
    x = jax.random.randint(key, (B, L), minval=0, maxval=c_in, dtype=jnp.int32)

    y = jax.block_until_ready(fixed_embedding(x, table))

    y_ref = jnp.take(table, x, axis=0)
    assert y.shape == (B, L, d_model)
    assert y.dtype == jnp.float32
    np.testing.assert_allclose(np.asarray(y), np.asarray(y_ref), rtol=1e-6, atol=1e-6)

    # Multi-step pipelined grid (3 steps) with small tiles on the packed path.
    key2 = jax.random.PRNGKey(1)
    x2 = jax.random.randint(key2, (4, 96), minval=0, maxval=c_in, dtype=jnp.int32)
    y2 = jax.block_until_ready(fixed_embedding(x2, table, block_rows=32))
    y2_ref = jnp.take(table, x2, axis=0)
    np.testing.assert_allclose(np.asarray(y2), np.asarray(y2_ref), rtol=1e-6, atol=1e-6)

    # pack = 1 path (d_model multiple of 128), 4-step grid.
    table3 = _build_fixed_table(32, 128)
    x3 = jax.random.randint(jax.random.PRNGKey(2), (2, 64), minval=0, maxval=32, dtype=jnp.int32)
    y3 = jax.block_until_ready(fixed_embedding(x3, table3))
    y3_ref = jnp.take(table3, x3, axis=0)
    np.testing.assert_allclose(np.asarray(y3), np.asarray(y3_ref), rtol=1e-6, atol=1e-6)

    print("KERNEL_OK")
</pallas_src>

<mosaic_0001>
module attributes {stable_mosaic.version = 11 : i64} {
  func.func @_embed_kernel(%arg0: i32, %arg1: memref<32x128xi8, #tpu.memory_space<vmem>>, %arg2: memref<128x128xbf16, #tpu.memory_space<vmem>>, %arg3: memref<128x128xbf16, #tpu.memory_space<vmem>>, %arg4: memref<128x128xbf16, #tpu.memory_space<vmem>>, %arg5: memref<32x128xf32, #tpu.memory_space<vmem>>) attributes {dimension_semantics = [#tpu.dimension_semantics<parallel>], iteration_bounds = array<i64: 1>, scalar_prefetch = 0 : i64, scratch_operands = 0 : i64, tpu.core_type = #tpu.core_type<tc>, window_params = [{transform_indices = @transform_0, window_bounds = array<i64: 32, 128>}, {pipeline_mode = #tpu.pipeline_mode<synchronous>, transform_indices = @transform_1, window_bounds = array<i64: 128, 128>}, {pipeline_mode = #tpu.pipeline_mode<synchronous>, transform_indices = @transform_2, window_bounds = array<i64: 128, 128>}, {pipeline_mode = #tpu.pipeline_mode<synchronous>, transform_indices = @transform_3, window_bounds = array<i64: 128, 128>}, {transform_indices = @transform_4, window_bounds = array<i64: 32, 128>}]} {
    %c0 = arith.constant 0 : index
    %c0_0 = arith.constant 0 : index
    %0 = vector.load %arg1[%c0, %c0_0] : memref<32x128xi8, #tpu.memory_space<vmem>>, vector<32x128xi8>
    %1 = arith.extsi %0 : vector<32x128xi8> to vector<32x128xi32>
    %2 = tpu.iota {dimensions = array<i32: 1>} : vector<32x128xi32>
    %3 = arith.cmpi eq, %1, %2 : vector<32x128xi32>
    %cst = arith.constant 1.000000e+00 : f32
    %cst_1 = arith.constant 0.000000e+00 : f32
    %4 = vector.broadcast %cst : f32 to vector<32x128xf32>
    %5 = vector.broadcast %cst_1 : f32 to vector<32x128xf32>
    %6 = arith.select %3, %4, %5 : vector<32x128xi1>, vector<32x128xf32>
    %7 = arith.truncf %6 : vector<32x128xf32> to vector<32x128xbf16>
    %c0_2 = arith.constant 0 : index
    %c0_3 = arith.constant 0 : index
    %8 = vector.load %arg2[%c0_2, %c0_3] : memref<128x128xbf16, #tpu.memory_space<vmem>>, vector<128x128xbf16>
    %cst_4 = arith.constant dense<0.000000e+00> : vector<32x128xf32>
    %9 = tpu.matmul %7, %8, %cst_4 {dimension_numbers = #tpu.dot_dimension_numbers<[1], [0], [0], [1], [0, 0, 1, 1], [], []>} : vector<32x128xbf16>, vector<128x128xbf16>, vector<32x128xf32> -> vector<32x128xf32>
    %c0_5 = arith.constant 0 : index
    %c0_6 = arith.constant 0 : index
    %10 = vector.load %arg3[%c0_5, %c0_6] : memref<128x128xbf16, #tpu.memory_space<vmem>>, vector<128x128xbf16>
    %cst_7 = arith.constant dense<0.000000e+00> : vector<32x128xf32>
    %11 = tpu.matmul %7, %10, %cst_7 {dimension_numbers = #tpu.dot_dimension_numbers<[1], [0], [0], [1], [0, 0, 1, 1], [], []>} : vector<32x128xbf16>, vector<128x128xbf16>, vector<32x128xf32> -> vector<32x128xf32>
    %12 = arith.addf %9, %11 : vector<32x128xf32>
    %c0_8 = arith.constant 0 : index
    %c0_9 = arith.constant 0 : index
    %13 = vector.load %arg4[%c0_8, %c0_9] : memref<128x128xbf16, #tpu.memory_space<vmem>>, vector<128x128xbf16>
    %cst_10 = arith.constant dense<0.000000e+00> : vector<32x128xf32>
    %14 = tpu.matmul %7, %13, %cst_10 {dimension_numbers = #tpu.dot_dimension_numbers<[1], [0], [0], [1], [0, 0, 1, 1], [], []>} : vector<32x128xbf16>, vector<128x128xbf16>, vector<32x128xf32> -> vector<32x128xf32>
    %15 = arith.addf %12, %14 : vector<32x128xf32>
    %c0_11 = arith.constant 0 : index
    %c0_12 = arith.constant 0 : index
    %16 = vector.load %arg5[%c0_11, %c0_12] : memref<32x128xf32, #tpu.memory_space<vmem>>, vector<32x128xf32>
    tpu.vector_store %arg5[%c0_11, %c0_12], %15 {strides = array<i32>} : memref<32x128xf32, #tpu.memory_space<vmem>>, vector<32x128xf32>,
    return
  }
  func.func @transform_0(%arg0: i32) -> (i32, i32) {
    %c0_i32 = arith.constant 0 : i32
    %c0_i32_0 = arith.constant 0 : i32
    return %arg0, %c0_i32 : i32, i32
  }
  func.func @transform_1(%arg0: i32) -> (i32, i32) {
    %c0_i32 = arith.constant 0 : i32
    %c0_i32_0 = arith.constant 0 : i32
    %c0_i32_1 = arith.constant 0 : i32
    return %c0_i32, %c0_i32_0 : i32, i32
  }
  func.func @transform_2(%arg0: i32) -> (i32, i32) {
    %c0_i32 = arith.constant 0 : i32
    %c0_i32_0 = arith.constant 0 : i32
    %c0_i32_1 = arith.constant 0 : i32
    return %c0_i32, %c0_i32_0 : i32, i32
  }
  func.func @transform_3(%arg0: i32) -> (i32, i32) {
    %c0_i32 = arith.constant 0 : i32
    %c0_i32_0 = arith.constant 0 : i32
    %c0_i32_1 = arith.constant 0 : i32
    return %c0_i32, %c0_i32_0 : i32, i32
  }
  func.func @transform_4(%arg0: i32) -> (i32, i32) {
    %c0_i32 = arith.constant 0 : i32
    %c0_i32_0 = arith.constant 0 : i32
    return %arg0, %c0_i32 : i32, i32
  }
}

</mosaic_0001>

<llo_original>
// kernel: tpu_custom_call.1
$region0: #{tpu_custom_call.1}
  #allocation0 [shape = 'u32[]', space=smem, size = 0x4, offset = 0x4, fixed_abs, tag = 'smem constant byte address 0x4 - core index']
  #allocation1 [shape = 'u32[144,128]{1,0:T(1,128)}', space=vmem, size = 0x12000, scoped, tag = 'internal scratch']
  %s0 = inlined_call_operand.hbm [shape: s8[32,128], index: 0, kind: input, shape index: {}]
  %s1 = inlined_call_operand.hbm [shape: bf16[128,128], index: 1, kind: input, shape index: {}]
  %s2 = inlined_call_operand.hbm [shape: bf16[128,128], index: 2, kind: input, shape index: {}]
  %s3 = inlined_call_operand.hbm [shape: bf16[128,128], index: 3, kind: input, shape index: {}]
  %s4 = inlined_call_operand.hbm [shape: f32[32,128], index: 4, kind: output, shape index: {}]
  %s5 = sld [smem:[#allocation0]]
  $region42: #{tpu_custom_call.1} parent=0
    _
  %s7 = ssub.s32 1, %s5
  %s8 = scalar_select 0, %s7, %s5
  $region1: #{tpu_custom_call.1} parent=0
    #allocation2 [shape = 'u8[4096]{0}', space=vmem, size = 0x1000, scoped, tag = 'input window, operand 0, single buffered']
    #allocation3 [shape = 's32[1]{0}', space=sflag, size = 0x4, scoped, tag = 'scoped memory for tpu_custom_call.1']
    #allocation4 [shape = 's32[1]{0}', space=sflag, size = 0x4, scoped, tag = 'scoped memory for tpu_custom_call.1']
    #allocation5 [shape = 'u8[32768]{0}', space=vmem, size = 0x8000, scoped, tag = 'input window, operand 1, single buffered']
    #allocation6 [shape = 's32[1]{0}', space=sflag, size = 0x4, scoped, tag = 'scoped memory for tpu_custom_call.1']
    #allocation7 [shape = 'u8[32768]{0}', space=vmem, size = 0x8000, scoped, tag = 'input window, operand 2, single buffered']
    #allocation8 [shape = 'u8[32768]{0}', space=vmem, size = 0x8000, scoped, tag = 'input window, operand 3, single buffered']
    #allocation9 [shape = 's32[1]{0}', space=sflag, size = 0x4, scoped, tag = 'scoped memory for tpu_custom_call.1']
    #allocation10 [shape = 'u8[16384]{0}', space=vmem, size = 0x4000, scoped, tag = 'output window, operand 0, single buffered']
    %9 = vsyncpa [#allocation3], 0
    %10 = vsyncpa [#allocation6], 0
    %11 = vsyncpa [#allocation9], 0
    %12 = vsyncpa [#allocation4], 0
    // Predicated region
    $region2: #{tpu_custom_call.1} parent=1 // pred_check
      _
    $region3: #{tpu_custom_call.1} parent=1 // pred_check_branch
      %14 = sbr.rel (0) target = $region5
    $region4: #{tpu_custom_call.1} parent=1 // pred_region
      %s16 = ssub.s32 128, 128
      %17 = vsyncadd [#allocation3], %s16
      %s19 = sshll.u32 [#allocation2], 4
      %s20 = int_to_ptr.vmem [resolvable:$true] %s19
      %22 = dma.hbm_to_vmem [thread:$0]  %s0, 128, %s20, [#allocation3]
    $region5: #{tpu_custom_call.1} parent=1 // pred_fallthru
      _
    // Predicated region
    $region6: #{tpu_custom_call.1} parent=1 // pred_check
      _
    $region7: #{tpu_custom_call.1} parent=1 // pred_check_branch
      %24 = sbr.rel (0) target = $region9
    $region8: #{tpu_custom_call.1} parent=1 // pred_region
      %s26 = ssub.s32 1024, 1024
      %27 = vsyncadd [#allocation6], %s26
      %s28 = sshll.u32 [#allocation5], 4
      %s29 = int_to_ptr.vmem [resolvable:$true] %s28
      %34 = dma.hbm_to_vmem [thread:$0]  %s1, 1024, %s29, [#allocation6], 64, 64, 4
    $region9: #{tpu_custom_call.1} parent=1 // pred_fallthru
      _
    // Predicated region
    $region10: #{tpu_custom_call.1} parent=1 // pred_check
      _
    $region11: #{tpu_custom_call.1} parent=1 // pred_check_branch
      %36 = sbr.rel (0) target = $region13
    $region12: #{tpu_custom_call.1} parent=1 // pred_region
      %s38 = ssub.s32 1024, 1024
      %39 = vsyncadd [#allocation6], %s38
      %s40 = sshll.u32 [#allocation7], 4
      %s41 = int_to_ptr.vmem [resolvable:$true] %s40
      %46 = dma.hbm_to_vmem [thread:$0]  %s2, 1024, %s41, [#allocation6], 64, 64, 4
    $region13: #{tpu_custom_call.1} parent=1 // pred_fallthru
      _
    // Predicated region
    $region14: #{tpu_custom_call.1} parent=1 // pred_check
      _
    $region15: #{tpu_custom_call.1} parent=1 // pred_check_branch
      %48 = sbr.rel (0) target = $region17
    $region16: #{tpu_custom_call.1} parent=1 // pred_region
      %s50 = ssub.s32 1024, 1024
      %51 = vsyncadd [#allocation9], %s50
      %s52 = sshll.u32 [#allocation8], 4
      %s53 = int_to_ptr.vmem [resolvable:$true] %s52
      %58 = dma.hbm_to_vmem [thread:$0]  %s3, 1024, %s53, [#allocation9], 64, 64, 4
    $region17: #{tpu_custom_call.1} parent=1 // pred_fallthru
      _
    // Predicated region
    $region18: #{tpu_custom_call.1} parent=1 // pred_check
      _
    $region19: #{tpu_custom_call.1} parent=1 // pred_check_branch
      %60 = sbr.rel (0) target = $region21
    $region20: #{tpu_custom_call.1} parent=1 // pred_region
      %61 = dma.done [#allocation3], 128
    $region21: #{tpu_custom_call.1} parent=1 // pred_fallthru
      _
    // Predicated region
    $region22: #{tpu_custom_call.1} parent=1 // pred_check
      _
    $region23: #{tpu_custom_call.1} parent=1 // pred_check_branch
      %63 = sbr.rel (0) target = $region25
    $region24: #{tpu_custom_call.1} parent=1 // pred_region
      %64 = dma.done [#allocation6], 1024
    $region25: #{tpu_custom_call.1} parent=1 // pred_fallthru
      _
    // Predicated region
    $region26: #{tpu_custom_call.1} parent=1 // pred_check
      _
    $region27: #{tpu_custom_call.1} parent=1 // pred_check_branch
      %66 = sbr.rel (0) target = $region29
    $region28: #{tpu_custom_call.1} parent=1 // pred_region
      %67 = dma.done [#allocation6], 1024
    $region29: #{tpu_custom_call.1} parent=1 // pred_fallthru
      _
    // Predicated region
    $region30: #{tpu_custom_call.1} parent=1 // pred_check
      _
    $region31: #{tpu_custom_call.1} parent=1 // pred_check_branch
      %69 = sbr.rel (0) target = $region33
    $region32: #{tpu_custom_call.1} parent=1 // pred_region
      %70 = dma.done [#allocation9], 1024
    $region33: #{tpu_custom_call.1} parent=1 // pred_fallthru
      _
    %v72 = vld [vmem:[#allocation2] sm:$0xff]
    %v73 = vunpack.c.0.s8 %v72
    %v74 = vunpack.c.1.s8 %v72
    %v75 = vunpack.c.2.s8 %v72
    %v76 = vunpack.c.3.s8 %v72
    %v77 = vlaneseq
    %v78 = vand.u32 %v77, 127
    %vm79 = vcmp.eq.s32.totalorder %v73, %v78
    %vm80 = vcmp.eq.s32.totalorder %v74, %v78
    %vm81 = vcmp.eq.s32.totalorder %v75, %v78
    %vm82 = vcmp.eq.s32.totalorder %v76, %v78
    %v83 = vsel %vm79, 1.0, 0.0
    %v84 = vsel %vm80, 1.0, 0.0
    %v85 = vsel %vm81, 1.0, 0.0
    %v86 = vsel %vm82, 1.0, 0.0
    %v87 = vpack.c.bf16 %v84, %v83
    %v88 = vpack.c.bf16 %v86, %v85
    %v89 = vld [vmem:[#allocation5] sm:$0xf]
    %v90 = vld [vmem:[#allocation5 + $0x4] sm:$0xf]
    %v91 = vld [vmem:[#allocation5 + $0x8] sm:$0xf]
    %v92 = vld [vmem:[#allocation5 + $0xc] sm:$0xf]
    %v93 = vld [vmem:[#allocation5 + $0x10] sm:$0xf]
    %v94 = vld [vmem:[#allocation5 + $0x14] sm:$0xf]
    %v95 = vld [vmem:[#allocation5 + $0x18] sm:$0xf]
    %v96 = vld [vmem:[#allocation5 + $0x1c] sm:$0xf]
    %v97 = vld [vmem:[#allocation5 + $0x20] sm:$0xf]
    %v98 = vld [vmem:[#allocation5 + $0x24] sm:$0xf]
    %v99 = vld [vmem:[#allocation5 + $0x28] sm:$0xf]
    %v100 = vld [vmem:[#allocation5 + $0x2c] sm:$0xf]
    %v101 = vld [vmem:[#allocation5 + $0x30] sm:$0xf]
    %v102 = vld [vmem:[#allocation5 + $0x34] sm:$0xf]
    %v103 = vld [vmem:[#allocation5 + $0x38] sm:$0xf]
    %v104 = vld [vmem:[#allocation5 + $0x3c] sm:$0xf]
    %v105 = vld [vmem:[#allocation7] sm:$0xf]
    %v106 = vld [vmem:[#allocation7 + $0x4] sm:$0xf]
    %v107 = vld [vmem:[#allocation7 + $0x8] sm:$0xf]
    %v108 = vld [vmem:[#allocation7 + $0xc] sm:$0xf]
    %v109 = vld [vmem:[#allocation7 + $0x10] sm:$0xf]
    %v110 = vld [vmem:[#allocation7 + $0x14] sm:$0xf]
    %v111 = vld [vmem:[#allocation7 + $0x18] sm:$0xf]
    %v112 = vld [vmem:[#allocation7 + $0x1c] sm:$0xf]
    %v113 = vld [vmem:[#allocation7 + $0x20] sm:$0xf]
    %v114 = vld [vmem:[#allocation7 + $0x24] sm:$0xf]
    %v115 = vld [vmem:[#allocation7 + $0x28] sm:$0xf]
    %v116 = vld [vmem:[#allocation7 + $0x2c] sm:$0xf]
    %v117 = vld [vmem:[#allocation7 + $0x30] sm:$0xf]
    %v118 = vld [vmem:[#allocation7 + $0x34] sm:$0xf]
    %v119 = vld [vmem:[#allocation7 + $0x38] sm:$0xf]
    %v120 = vld [vmem:[#allocation7 + $0x3c] sm:$0xf]
    %v137 = vunpack.c.l.b16 %v105
    %v138 = vunpack.c.l.b16 %v106
    %v139 = vunpack.c.l.b16 %v107
    %v140 = vunpack.c.l.b16 %v108
    %v141 = vunpack.c.l.b16 %v109
    %v142 = vunpack.c.l.b16 %v110
    %v143 = vunpack.c.l.b16 %v111
    %v144 = vunpack.c.l.b16 %v112
    %v145 = vunpack.c.l.b16 %v113
    %v146 = vunpack.c.l.b16 %v114
    %v147 = vunpack.c.l.b16 %v115
    %v148 = vunpack.c.l.b16 %v116
    %v149 = vunpack.c.l.b16 %v117
    %v150 = vunpack.c.l.b16 %v118
    %v151 = vunpack.c.l.b16 %v119
    %v152 = vunpack.c.l.b16 %v120
    %v153 = vpack.c.b16 %v138, %v137
    %v154 = vpack.c.b16 %v140, %v139
    %v155 = vpack.c.b16 %v142, %v141
    %v156 = vpack.c.b16 %v144, %v143
    %v157 = vpack.c.b16 %v146, %v145
    %v158 = vpack.c.b16 %v148, %v147
    %v159 = vpack.c.b16 %v150, %v149
    %v160 = vpack.c.b16 %v152, %v151
    %169 = vmatprep.subr.bf16.mxu0 0
    %170 = vmatpush1.bf16.msra.mxu0 %v153
    %171 = vmatprep.subr.bf16.mxu0 0
    %172 = vmatpush1.bf16.msra.mxu0 %v154
    %173 = vmatprep.subr.bf16.mxu0 0
    %174 = vmatpush1.bf16.msra.mxu0 %v155
    %175 = vmatprep.subr.bf16.mxu0 0
    %176 = vmatpush1.bf16.msra.mxu0 %v156
    %177 = vmatprep.subr.bf16.mxu0 0
    %178 = vmatpush1.bf16.msra.mxu0 %v157
    %179 = vmatprep.subr.bf16.mxu0 0
    %180 = vmatpush1.bf16.msra.mxu0 %v158
    %181 = vmatprep.subr.bf16.mxu0 0
    %182 = vmatpush1.bf16.msra.mxu0 %v159
    %183 = vmatprep.subr.bf16.mxu0 0
    %184 = vmatpush1.bf16.msra.mxu0 %v160
    %185 = vmatprep.subr.bf16.mxu0 0
    %186 = vmatpush1.bf16.msra.mxu0 0
    %187 = vmatprep.subr.bf16.mxu0 0
    %188 = vmatpush1.bf16.msra.mxu0 0
    %189 = vmatprep.subr.bf16.mxu0 0
    %190 = vmatpush1.bf16.msra.mxu0 0
    %191 = vmatprep.subr.bf16.mxu0 0
    %192 = vmatpush1.bf16.msra.mxu0 0
    %193 = vmatprep.subr.bf16.mxu0 0
    %194 = vmatpush1.bf16.msra.mxu0 0
    %195 = vmatprep.subr.bf16.mxu0 0
    %196 = vmatpush1.bf16.msra.mxu0 0
    %197 = vmatprep.subr.bf16.mxu0 0
    %198 = vmatpush1.bf16.msra.mxu0 0
    %199 = vmatprep.subr.bf16.mxu0 0
    %200 = vmatpush1.bf16.msra.mxu0 0
    %201 = vmatprep.mubr.bf16.mxu0 0
    %202 = vmatmul.mubr.bf16.gmra.mrb[0].mxu0 %v87
    %v203 = vpop.f32.mrb[0].mxu0
    %v204 = vadd.f32 0.0, %v203
    %v205 = vpop.f32.mrb[0].mxu0
    %v206 = vpop.f32.mrb[0].mxu0
    %v207 = vadd.f32 0.0, %v206
    %v208 = vpop.f32.mrb[0].mxu0
    %209 = vmatprep.mubr.bf16.mxu0 0
    %210 = vmatmul.mubr.bf16.gmra.mrb[0].mxu0 %v88
    %v211 = vpop.f32.mrb[0].mxu0
    %v212 = vadd.f32 0.0, %v211
    %v213 = vpop.f32.mrb[0].mxu0
    %v214 = vpop.f32.mrb[0].mxu0
    %v215 = vadd.f32 0.0, %v214
    %v216 = vpop.f32.mrb[0].mxu0
    %217 = vdwg.mxu0
    %v234 = vunpack.c.l.b16 %v89
    %v235 = vunpack.c.l.b16 %v90
    %v236 = vunpack.c.l.b16 %v91
    %v237 = vunpack.c.l.b16 %v92
    %v238 = vunpack.c.l.b16 %v93
    %v239 = vunpack.c.l.b16 %v94
    %v240 = vunpack.c.l.b16 %v95
    %v241 = vunpack.c.l.b16 %v96
    %v242 = vunpack.c.l.b16 %v97
    %v243 = vunpack.c.l.b16 %v98
    %v244 = vunpack.c.l.b16 %v99
    %v245 = vunpack.c.l.b16 %v100
    %v246 = vunpack.c.l.b16 %v101
    %v247 = vunpack.c.l.b16 %v102
    %v248 = vunpack.c.l.b16 %v103
    %v249 = vunpack.c.l.b16 %v104
    %v250 = vpack.c.b16 %v235, %v234
    %v251 = vpack.c.b16 %v237, %v236
    %v252 = vpack.c.b16 %v239, %v238
    %v253 = vpack.c.b16 %v241, %v240
    %v254 = vpack.c.b16 %v243, %v242
    %v255 = vpack.c.b16 %v245, %v244
    %v256 = vpack.c.b16 %v247, %v246
    %v257 = vpack.c.b16 %v249, %v248
    %266 = vmatprep.subr.bf16.mxu0 0
    %267 = vmatpush1.bf16.msra.mxu0 %v250
    %268 = vmatprep.subr.bf16.mxu0 0
    %269 = vmatpush1.bf16.msra.mxu0 %v251
    %270 = vmatprep.subr.bf16.mxu0 0
    %271 = vmatpush1.bf16.msra.mxu0 %v252
    %272 = vmatprep.subr.bf16.mxu0 0
    %273 = vmatpush1.bf16.msra.mxu0 %v253
    %274 = vmatprep.subr.bf16.mxu0 0
    %275 = vmatpush1.bf16.msra.mxu0 %v254
    %276 = vmatprep.subr.bf16.mxu0 0
    %277 = vmatpush1.bf16.msra.mxu0 %v255
    %278 = vmatprep.subr.bf16.mxu0 0
    %279 = vmatpush1.bf16.msra.mxu0 %v256
    %280 = vmatprep.subr.bf16.mxu0 0
    %281 = vmatpush1.bf16.msra.mxu0 %v257
    %282 = vmatprep.subr.bf16.mxu0 0
    %283 = vmatpush1.bf16.msra.mxu0 0
    %284 = vmatprep.subr.bf16.mxu0 0
    %285 = vmatpush1.bf16.msra.mxu0 0
    %286 = vmatprep.subr.bf16.mxu0 0
    %287 = vmatpush1.bf16.msra.mxu0 0
    %288 = vmatprep.subr.bf16.mxu0 0
    %289 = vmatpush1.bf16.msra.mxu0 0
    %290 = vmatprep.subr.bf16.mxu0 0
    %291 = vmatpush1.bf16.msra.mxu0 0
    %292 = vmatprep.subr.bf16.mxu0 0
    %293 = vmatpush1.bf16.msra.mxu0 0
    %294 = vmatprep.subr.bf16.mxu0 0
    %295 = vmatpush1.bf16.msra.mxu0 0
    %296 = vmatprep.subr.bf16.mxu0 0
    %297 = vmatpush1.bf16.msra.mxu0 0
    %298 = vmatprep.mubr.bf16.mxu0 0
    %299 = vmatmul.mubr.bf16.gmra.mrb[0].mxu0 %v87
    %v300 = vpop.f32.mrb[0].mxu0
    %v301 = vadd.f32 %v204, %v300
    %v302 = vpop.f32.mrb[0].mxu0
    %v303 = vpop.f32.mrb[0].mxu0
    %v304 = vadd.f32 %v207, %v303
    %v305 = vpop.f32.mrb[0].mxu0
    %306 = vmatprep.mubr.bf16.mxu0 0
    %307 = vmatmul.mubr.bf16.gmra.mrb[0].mxu0 %v88
    %v308 = vpop.f32.mrb[0].mxu0
    %v309 = vadd.f32 %v212, %v308
    %v310 = vpop.f32.mrb[0].mxu0
    %v311 = vpop.f32.mrb[0].mxu0
    %v312 = vadd.f32 %v215, %v311
    %v313 = vpop.f32.mrb[0].mxu0
    %314 = vdwg.mxu0
    %v315 = vld [vmem:[#allocation8] sm:$0xf]
    %v316 = vld [vmem:[#allocation8 + $0x4] sm:$0xf]
    %v317 = vld [vmem:[#allocation8 + $0x8] sm:$0xf]
    %v318 = vld [vmem:[#allocation8 + $0xc] sm:$0xf]
    %v319 = vld [vmem:[#allocation8 + $0x10] sm:$0xf]
    %v320 = vld [vmem:[#allocation8 + $0x14] sm:$0xf]
    %v321 = vld [vmem:[#allocation8 + $0x18] sm:$0xf]
    %v322 = vld [vmem:[#allocation8 + $0x1c] sm:$0xf]
    %v323 = vld [vmem:[#allocation8 + $0x20] sm:$0xf]
    %v324 = vld [vmem:[#allocation8 + $0x24] sm:$0xf]
    %v325 = vld [vmem:[#allocation8 + $0x28] sm:$0xf]
    %v326 = vld [vmem:[#allocation8 + $0x2c] sm:$0xf]
    %v327 = vld [vmem:[#allocation8 + $0x30] sm:$0xf]
    %v328 = vld [vmem:[#allocation8 + $0x34] sm:$0xf]
    %v329 = vld [vmem:[#allocation8 + $0x38] sm:$0xf]
    %v330 = vld [vmem:[#allocation8 + $0x3c] sm:$0xf]
    %v347 = vunpack.c.l.b16 %v315
    %v348 = vunpack.c.l.b16 %v316
    %v349 = vunpack.c.l.b16 %v317
    %v350 = vunpack.c.l.b16 %v318
    %v351 = vunpack.c.l.b16 %v319
    %v352 = vunpack.c.l.b16 %v320
    %v353 = vunpack.c.l.b16 %v321
    %v354 = vunpack.c.l.b16 %v322
    %v355 = vunpack.c.l.b16 %v323
    %v356 = vunpack.c.l.b16 %v324
    %v357 = vunpack.c.l.b16 %v325
    %v358 = vunpack.c.l.b16 %v326
    %v359 = vunpack.c.l.b16 %v327
    %v360 = vunpack.c.l.b16 %v328
    %v361 = vunpack.c.l.b16 %v329
    %v362 = vunpack.c.l.b16 %v330
    %v363 = vpack.c.b16 %v348, %v347
    %v364 = vpack.c.b16 %v350, %v349
    %v365 = vpack.c.b16 %v352, %v351
    %v366 = vpack.c.b16 %v354, %v353
    %v367 = vpack.c.b16 %v356, %v355
    %v368 = vpack.c.b16 %v358, %v357
    %v369 = vpack.c.b16 %v360, %v359
    %v370 = vpack.c.b16 %v362, %v361
    %379 = vmatprep.subr.bf16.mxu0 0
    %380 = vmatpush1.bf16.msra.mxu0 %v363
    %381 = vmatprep.subr.bf16.mxu0 0
    %382 = vmatpush1.bf16.msra.mxu0 %v364
    %383 = vmatprep.subr.bf16.mxu0 0
    %384 = vmatpush1.bf16.msra.mxu0 %v365
    %385 = vmatprep.subr.bf16.mxu0 0
    %386 = vmatpush1.bf16.msra.mxu0 %v366
    %387 = vmatprep.subr.bf16.mxu0 0
    %388 = vmatpush1.bf16.msra.mxu0 %v367
    %389 = vmatprep.subr.bf16.mxu0 0
    %390 = vmatpush1.bf16.msra.mxu0 %v368
    %391 = vmatprep.subr.bf16.mxu0 0
    %392 = vmatpush1.bf16.msra.mxu0 %v369
    %393 = vmatprep.subr.bf16.mxu0 0
    %394 = vmatpush1.bf16.msra.mxu0 %v370
    %395 = vmatprep.subr.bf16.mxu0 0
    %396 = vmatpush1.bf16.msra.mxu0 0
    %397 = vmatprep.subr.bf16.mxu0 0
    %398 = vmatpush1.bf16.msra.mxu0 0
    %399 = vmatprep.subr.bf16.mxu0 0
    %400 = vmatpush1.bf16.msra.mxu0 0
    %401 = vmatprep.subr.bf16.mxu0 0
    %402 = vmatpush1.bf16.msra.mxu0 0
    %403 = vmatprep.subr.bf16.mxu0 0
    %404 = vmatpush1.bf16.msra.mxu0 0
    %405 = vmatprep.subr.bf16.mxu0 0
    %406 = vmatpush1.bf16.msra.mxu0 0
    %407 = vmatprep.subr.bf16.mxu0 0
    %408 = vmatpush1.bf16.msra.mxu0 0
    %409 = vmatprep.subr.bf16.mxu0 0
    %410 = vmatpush1.bf16.msra.mxu0 0
    %411 = vmatprep.mubr.bf16.mxu0 0
    %412 = vmatmul.mubr.bf16.gmra.mrb[0].mxu0 %v87
    %v413 = vpop.f32.mrb[0].mxu0
    %v414 = vadd.f32 0.0, %v413
    %v415 = vpop.f32.mrb[0].mxu0
    %v416 = vpop.f32.mrb[0].mxu0
    %v417 = vadd.f32 0.0, %v416
    %v418 = vpop.f32.mrb[0].mxu0
    %419 = vmatprep.mubr.bf16.mxu0 0
    %420 = vmatmul.mubr.bf16.gmra.mrb[0].mxu0 %v88
    %v421 = vpop.f32.mrb[0].mxu0
    %v422 = vadd.f32 0.0, %v421
    %v423 = vpop.f32.mrb[0].mxu0
    %v424 = vpop.f32.mrb[0].mxu0
    %v425 = vadd.f32 0.0, %v424
    %v426 = vpop.f32.mrb[0].mxu0
    %427 = vdwg.mxu0
    %v428 = vadd.f32 %v301, %v414
    %v429 = vadd.f32 %v304, %v417
    %v430 = vadd.f32 %v309, %v422
    %v431 = vadd.f32 %v312, %v425
    %432 = vst [vmem:[#allocation10] sm:$0xff] %v428
    %433 = vst [vmem:[#allocation10 + $0x8] sm:$0xff] %v429
    %434 = vst [vmem:[#allocation10 + $0x10] sm:$0xff] %v430
    %435 = vst [vmem:[#allocation10 + $0x18] sm:$0xff] %v431
    // Predicated region
    $region34: #{tpu_custom_call.1} parent=1 // pred_check
      _
    $region35: #{tpu_custom_call.1} parent=1 // pred_check_branch
      %437 = sbr.rel (0) target = $region37
    $region36: #{tpu_custom_call.1} parent=1 // pred_region
      %s439 = ssub.s32 512, 512
      %440 = vsyncadd [#allocation4], %s439
      %s441 = sshll.u32 [#allocation10], 4
      %s442 = int_to_ptr.vmem [resolvable:$true] %s441
      %447 = dma.vmem_to_hbm [thread:$0]  %s442, 512, %s4, [#allocation4], 128, 128, 8
    $region37: #{tpu_custom_call.1} parent=1 // pred_fallthru
      _
    // Predicated region
    $region38: #{tpu_custom_call.1} parent=1 // pred_check
      _
    $region39: #{tpu_custom_call.1} parent=1 // pred_check_branch
      %449 = sbr.rel (0) target = $region41
    $region40: #{tpu_custom_call.1} parent=1 // pred_region
      %450 = dma.done [#allocation4], 512
    $region41: #{tpu_custom_call.1} parent=1 // pred_fallthru
      _
    %451 = vsyncpa [#allocation3], 1
    %452 = vsyncpa [#allocation6], 1
    %453 = vsyncpa [#allocation9], 1
    %454 = vsyncpa [#allocation4], 1

</llo_original>
